<compile_context>
chip_gen: v7x
topology: tpu7x:2x2x1
jax: 0.10.0
libtpu: 0.0.40
codegen_flags: <defaults>
</compile_context>

<pallas_src>
import jax
import jax.numpy as jnp
from jax.experimental import pallas as pl
from jax.experimental.pallas import tpu as pltpu


def _permute_kernel(x_ref, o_ref):
    # x_ref: (H*W, Cb) VMEM tile  ->  o_ref: (Cb, H*W) VMEM tile (XLU transpose)
    o_ref[...] = x_ref[...].T


def _pick_channel_block(C):
    """Channel block size.

    Prefer exactly two channel blocks (cb a multiple of 128): even block
    count -> balanced megacore sharding on v7x, only 2 grid steps (overhead
    dominated kernel), and still enough steps for double-buffer overlap on
    v5e.  Fall back to a single full-extent block (always legal).
    """
    half = C // 2
    if C % 2 == 0 and half % 128 == 0:
        return half
    if C % 128 == 0:
        return C
    return C  # full-extent block == full array dim (always legal)


def permute_nhwc_to_nchw(x):
    """x: (N, H, W, C)  ->  (N, C, H, W), computed in a Pallas TPU kernel."""
    N, H, W, C = x.shape
    hw = H * W
    cb = _pick_channel_block(C)
    n_cblocks = C // cb

    # Free metadata reshape: NHWC is row-major, so (N, H, W, C) -> (N, H*W, C)
    # touches no data.
    x2 = x.reshape(N, hw, C)

    if N == 1:
        # Drop the degenerate batch grid axis entirely: 1-D grid over channel
        # blocks, flat 2D tiles.
        out = pl.pallas_call(
            _permute_kernel,
            out_shape=jax.ShapeDtypeStruct((C, hw), x.dtype),
            grid=(n_cblocks,),
            in_specs=[pl.BlockSpec((hw, cb), lambda c: (0, c))],
            # Lane-dense output tile: last dim is the full H*W extent.
            out_specs=pl.BlockSpec((cb, hw), lambda c: (c, 0)),
            compiler_params=pltpu.CompilerParams(
                dimension_semantics=("parallel",),
            ),
        )(x2.reshape(hw, C))
        return out.reshape(N, C, H, W)

    out = pl.pallas_call(
        _permute_kernel,
        out_shape=jax.ShapeDtypeStruct((N, C, hw), x.dtype),
        grid=(N, n_cblocks),
        in_specs=[
            # Batch dim squeezed (None); kernel sees a 2D (hw, cb) tile.
            pl.BlockSpec((None, hw, cb), lambda b, c: (b, 0, c)),
        ],
        out_specs=pl.BlockSpec((None, cb, hw), lambda b, c: (b, c, 0)),
        compiler_params=pltpu.CompilerParams(
            dimension_semantics=("parallel", "parallel"),
        ),
    )(x2)
    return out.reshape(N, C, H, W)


# TODO(synk): a standalone ~600 KB relayout is launch/pipeline-overhead
# dominated on every TPU generation; the decisive win is fusing this permute
# into the producer/consumer kernel's out_specs / in_specs index_map instead
# of paying a separate pallas_call.


if __name__ == "__main__":
    key = jax.random.PRNGKey(0)

    # Same shape convention as the PyTorch module's input x102: [1, 14, 14, 768]
    x = jax.random.normal(key, (1, 14, 14, 768), dtype=jnp.float32)
    out = jax.block_until_ready(permute_nhwc_to_nchw(x))
    ref = jnp.transpose(x, (0, 3, 1, 2))
    assert out.shape == (1, 768, 14, 14), out.shape
    assert out.dtype == x.dtype
    assert jnp.array_equal(out, ref), "mismatch vs reference transpose (N=1)"

    # Also exercise the batched (N > 1) path once.
    xb = jax.random.normal(jax.random.PRNGKey(1), (2, 14, 14, 768), dtype=jnp.float32)
    outb = jax.block_until_ready(permute_nhwc_to_nchw(xb))
    refb = jnp.transpose(xb, (0, 3, 1, 2))
    assert outb.shape == (2, 768, 14, 14), outb.shape
    assert jnp.array_equal(outb, refb), "mismatch vs reference transpose (N=2)"

    print("KERNEL_OK")
</pallas_src>

<mosaic_0001>
module attributes {stable_mosaic.version = 11 : i64} {
  func.func @_permute_kernel(%arg0: i32, %arg1: memref<196x384xf32, #tpu.memory_space<vmem>>, %arg2: memref<384x196xf32, #tpu.memory_space<vmem>>) attributes {dimension_semantics = [#tpu.dimension_semantics<parallel>], iteration_bounds = array<i64: 2>, scalar_prefetch = 0 : i64, scratch_operands = 0 : i64, tpu.core_type = #tpu.core_type<tc>, window_params = [{transform_indices = @transform_0, window_bounds = array<i64: 196, 384>}, {transform_indices = @transform_1, window_bounds = array<i64: 384, 196>}]} {
    %c0 = arith.constant 0 : index
    %c0_0 = arith.constant 0 : index
    %0 = vector.load %arg1[%c0, %c0_0] : memref<196x384xf32, #tpu.memory_space<vmem>>, vector<196x384xf32>
    %1 = tpu.transpose %0, [1, 0] : vector<196x384xf32> -> vector<384x196xf32>
    %c0_1 = arith.constant 0 : index
    %c0_2 = arith.constant 0 : index
    %2 = vector.load %arg2[%c0_1, %c0_2] : memref<384x196xf32, #tpu.memory_space<vmem>>, vector<384x196xf32>
    tpu.vector_store %arg2[%c0_1, %c0_2], %1 {strides = array<i32>} : memref<384x196xf32, #tpu.memory_space<vmem>>, vector<384x196xf32>,
    return
  }
  func.func @transform_0(%arg0: i32) -> (i32, i32) {
    %c0_i32 = arith.constant 0 : i32
    %c0_i32_0 = arith.constant 0 : i32
    return %c0_i32, %arg0 : i32, i32
  }
  func.func @transform_1(%arg0: i32) -> (i32, i32) {
    %c0_i32 = arith.constant 0 : i32
    %c0_i32_0 = arith.constant 0 : i32
    return %arg0, %c0_i32 : i32, i32
  }
}

</mosaic_0001>

<llo_original>
// kernel: tpu_custom_call.1
$region0: #{tpu_custom_call.1}
  #allocation0 [shape = 'u32[]', space=smem, size = 0x4, offset = 0x4, fixed_abs, tag = 'smem constant byte address 0x4 - core index']
  #allocation1 [shape = 'u32[144,128]{1,0:T(1,128)}', space=vmem, size = 0x12000, scoped, tag = 'internal scratch']
  %s0 = inlined_call_operand.hbm [shape: f32[196,768], index: 0, kind: input, shape index: {}]
  %s1 = inlined_call_operand.vmem [shape: f32[768,196], index: 1, kind: output, shape index: {}]
  %s2 = sld [smem:[#allocation0]]
  $region41: #{tpu_custom_call.1} parent=0
    _
  %s4 = ssub.s32 1, %s2
  %s5 = scalar_select 0, %s4, %s2
  $region1: #{tpu_custom_call.1} parent=0
    #allocation2 [shape = 'u8[614400]{0}', space=vmem, size = 0x96000, scoped, tag = 'input window, operand 0']
    #allocation3 [shape = 's32[2]{0}', space=sflag, size = 0x8, scoped, tag = 'scoped memory for tpu_custom_call.1']
    %6 = vsyncpa [#allocation3], 0
    %s7 = scalar_lea.sflag [#allocation3], 1
    %8 = vsyncpa %s7, 0
    loop: start=0, step=1, limit=4
    $region2: #{tpu_custom_call.1} parent=1 // loop_pre_header
      _
    $region3: #{tpu_custom_call.1} parent=1 // loop_header
      %s10 = sphi 0, %s14
      %p11 = scmp.ge.s32.totalorder %s10, 4
      %s20 = sphi 0, %s22
      %s23 = sphi 0, %s20
      %s24 = sphi 0, %s23
      %s40 = sphi 0, %s24
      %s46 = sphi 0, %s48
      %s49 = sphi 0, %s46
      %s50 = sphi 0, %s49
      %s66 = sphi 0, %s50
    $region4: #{tpu_custom_call.1} parent=1 // loop_header_branch
      %13 = sbr.rel (%p11) target = $region8
    $region5: #{tpu_custom_call.1} parent=1 // loop_body
      %s15 = ssub.s32 %s10, 1
      %s16 = ssub.s32 %s10, 2
      %s17 = sadd.s32 %s10, 1
      %s18 = ssub.s32 %s10, %s17
      %p19 = scmp.eq.s32.totalorder %s18, 0
      %s21 = sadd.s32 %s20, 1
      %s22 = scalar_select %p19, %s20, %s21
      %p25 = pneg %p19
      %p26 = scmp.eq.s32.totalorder %s10, 1
      %p27 = por %p25, %p26
      %p28 = scmp.ne.s32.totalorder %s20, %s23
      %p29 = scmp.eq.s32.totalorder %s10, 0
      %p30 = por %p28, %p29
      %p31 = scmp.ne.s32.totalorder %s20, %s23
      %p32 = scmp.eq.s32.totalorder %s15, 1
      %p33 = por %p31, %p32
      %p34 = scmp.ne.s32.totalorder %s23, %s24
      %p35 = scmp.eq.s32.totalorder %s15, 0
      %p36 = por %p34, %p35
      %p37 = scmp.ne.s32.totalorder %s23, %s24
      %p38 = scmp.eq.s32.totalorder %s16, 1
      %p39 = por %p37, %p38
      %p41 = scmp.ne.s32.totalorder %s24, %s40
      %p42 = scmp.eq.s32.totalorder %s16, 0
      %p43 = por %p41, %p42
      %s44 = ssub.s32 %s10, %s17
      %p45 = scmp.eq.s32.totalorder %s44, 0
      %s47 = sadd.s32 %s46, 1
      %s48 = scalar_select %p45, %s46, %s47
      %p51 = pneg %p45
      %p52 = scmp.eq.s32.totalorder %s10, 1
      %p53 = por %p51, %p52
      %p54 = scmp.ne.s32.totalorder %s46, %s49
      %p55 = scmp.eq.s32.totalorder %s10, 0
      %p56 = por %p54, %p55
      %p57 = scmp.ne.s32.totalorder %s46, %s49
      %p58 = scmp.eq.s32.totalorder %s15, 1
      %p59 = por %p57, %p58
      %p60 = scmp.ne.s32.totalorder %s49, %s50
      %p61 = scmp.eq.s32.totalorder %s15, 0
      %p62 = por %p60, %p61
      %p63 = scmp.ne.s32.totalorder %s49, %s50
      %p64 = scmp.eq.s32.totalorder %s16, 1
      %p65 = por %p63, %p64
      %p67 = scmp.ne.s32.totalorder %s50, %s66
      %p68 = scmp.eq.s32.totalorder %s16, 0
      %p69 = por %p67, %p68
      %p70 = scmp.le.s32.totalorder 1, %s10
      %p71 = scmp.lt.s32.totalorder %s10, 3
      %p72 = pnand %p70, %p71
      %p73 = pneg %p72
      // Predicated region
      $region9: #{tpu_custom_call.1} parent=5 // pred_check
        _
      $region10: #{tpu_custom_call.1} parent=5 // pred_check_branch
        %75 = sbr.rel (%p72) target = $region12
      $region11: #{tpu_custom_call.1} parent=5 // pred_region
        %s76 = ssub.s32 %s10, 1
      $region12: #{tpu_custom_call.1} parent=5 // pred_fallthru
        _
      %p77 = scmp.lt.s32.totalorder %s10, 2
      // Predicated region
      $region13: #{tpu_custom_call.1} parent=5 // pred_check
        %p78 = pneg %p77
      $region14: #{tpu_custom_call.1} parent=5 // pred_check_branch
        %80 = sbr.rel (%p78) target = $region16
      $region15: #{tpu_custom_call.1} parent=5 // pred_region
        // Predicated region
        $region17: #{tpu_custom_call.1} parent=15 // pred_check
          %p81 = pneg %p30
        $region18: #{tpu_custom_call.1} parent=15 // pred_check_branch
          %83 = sbr.rel (%p81) target = $region20
        $region19: #{tpu_custom_call.1} parent=15 // pred_region
          %s84 = sand.u32 %s20, 1
          %s85 = scalar_lea.sflag [#allocation3], %s84
          %s86 = sand.u32 %s20, 1
          %s87 = smul.addr %s86, 600
          %s88 = scalar_lea.vmem [#allocation2], %s87
          %s89 = smul.u32 3, %s10
          %s91 = ssub.s32 9600, 9600
          %92 = vsyncadd %s85, %s91
          %s93 = smul.addr %s89, 128
          %s94 = scalar_lea.hbm %s0, %s93
          %s95 = sshll.u32 %s88, 4
          %s96 = int_to_ptr.vmem [resolvable:$true] %s95
          %101 = dma.hbm_to_vmem [thread:$0]  %s94, 9600, %s96, %s85, 768, 384, 24
        $region20: #{tpu_custom_call.1} parent=15 // pred_fallthru
          _
      $region16: #{tpu_custom_call.1} parent=5 // pred_fallthru
        _
      %p102 = scmp.le.s32.totalorder 1, %s10
      %p103 = scmp.lt.s32.totalorder %s10, 3
      %p104 = pnand %p102, %p103
      %p105 = pneg %p104
      // Predicated region
      $region21: #{tpu_custom_call.1} parent=5 // pred_check
        _
      $region22: #{tpu_custom_call.1} parent=5 // pred_check_branch
        %107 = sbr.rel (%p104) target = $region24
      $region23: #{tpu_custom_call.1} parent=5 // pred_region
        %s108 = ssub.s32 %s10, 1
        %s109 = sand.u32 %s23, 1
        %s110 = scalar_lea.sflag [#allocation3], %s109
        %s111 = sand.u32 %s23, 1
        %s112 = smul.addr %s111, 600
        %s113 = scalar_lea.vmem [#allocation2], %s112
        // Predicated region
        $region25: #{tpu_custom_call.1} parent=23 // pred_check
          %p114 = pneg %p36
        $region26: #{tpu_custom_call.1} parent=23 // pred_check_branch
          %116 = sbr.rel (%p114) target = $region28
        $region27: #{tpu_custom_call.1} parent=23 // pred_region
          %117 = dma.done %s110, 9600
        $region28: #{tpu_custom_call.1} parent=23 // pred_fallthru
          _
        %s118 = sand.u32 %s23, 1
        %s119 = scalar_lea.sflag [#allocation3], %s118
        %s120 = sand.u32 %s23, 1
        %s121 = smul.addr %s120, 600
        %s122 = scalar_lea.vmem [#allocation2], %s121
        %p123 = pneg %p36
        %p124 = pneg %p33
        %p125 = pneg %p62
        %p126 = pneg %p59
        %s127 = smul.u32 48, %s15
        %p128 = scmp.lt.s32.totalorder %s127, 95
        %s129 = scalar_select %p128, %s127, 95
        %s130 = smul.addr %s129, 2
        %s131 = smul.addr %s130, 8
        %s132 = scalar_lea.vmem %s1, %s131
        %s133 = smul.u32 3, %s15
        %s134 = smul.u32 48, %s15
        %p135 = scmp.lt.s32.totalorder %s134, 95
        %s136 = scalar_select %p135, %s134, 95
        %s137 = smul.addr %s136, 2
        %s138 = smul.addr %s137, 8
        %s139 = scalar_lea.vmem %s1, %s138
        %s140 = smul.u32 48, %s15
        %v141 = vld [vmem:[%s113] sm:$0xff]
        %v142 = vld [vmem:[%s113 + $0x8] sm:$0xff]
        %v143 = vld [vmem:[%s113 + $0x10] sm:$0xff]
        %v144 = vld [vmem:[%s113 + $0x18] sm:$0xff]
        %v145 = vld [vmem:[%s113 + $0x20] sm:$0xff]
        %v146 = vld [vmem:[%s113 + $0x28] sm:$0xff]
        %v147 = vld [vmem:[%s113 + $0x30] sm:$0xff]
        %v148 = vld [vmem:[%s113 + $0x38] sm:$0xff]
        %v149 = vld [vmem:[%s113 + $0x40] sm:$0xff]
        %v150 = vld [vmem:[%s113 + $0x48] sm:$0xff]
        %v151 = vld [vmem:[%s113 + $0x50] sm:$0xff]
        %v152 = vld [vmem:[%s113 + $0x58] sm:$0xff]
        %v153 = vld [vmem:[%s113 + $0x60] sm:$0xff]
        %v154 = vld [vmem:[%s113 + $0x68] sm:$0xff]
        %v155 = vld [vmem:[%s113 + $0x70] sm:$0xff]
        %v156 = vld [vmem:[%s113 + $0x78] sm:$0xff]
        %v157 = vld [vmem:[%s113 + $0x80] sm:$0xff]
        %v158 = vld [vmem:[%s113 + $0x88] sm:$0xff]
        %v159 = vld [vmem:[%s113 + $0x90] sm:$0xff]
        %v160 = vld [vmem:[%s113 + $0x98] sm:$0xff]
        %v161 = vld [vmem:[%s113 + $0xa0] sm:$0xff]
        %v162 = vld [vmem:[%s113 + $0xa8] sm:$0xff]
        %v163 = vld [vmem:[%s113 + $0xb0] sm:$0xff]
        %v164 = vld [vmem:[%s113 + $0xb8] sm:$0xff]
        %v165 = vld [vmem:[%s113 + $0xc0] sm:$0xff]
        %v166 = vld [vmem:[%s113 + $0xc8] sm:$0xff]
        %v167 = vld [vmem:[%s113 + $0xd0] sm:$0xff]
        %v168 = vld [vmem:[%s113 + $0xd8] sm:$0xff]
        %v169 = vld [vmem:[%s113 + $0xe0] sm:$0xff]
        %v170 = vld [vmem:[%s113 + $0xe8] sm:$0xff]
        %v171 = vld [vmem:[%s113 + $0xf0] sm:$0xff]
        %v172 = vld [vmem:[%s113 + $0xf8] sm:$0xff]
        %v173 = vld [vmem:[%s113 + $0x100] sm:$0xff]
        %v174 = vld [vmem:[%s113 + $0x108] sm:$0xff]
        %v175 = vld [vmem:[%s113 + $0x110] sm:$0xff]
        %v176 = vld [vmem:[%s113 + $0x118] sm:$0xff]
        %v177 = vld [vmem:[%s113 + $0x120] sm:$0xff]
        %v178 = vld [vmem:[%s113 + $0x128] sm:$0xff]
        %v179 = vld [vmem:[%s113 + $0x130] sm:$0xff]
        %v180 = vld [vmem:[%s113 + $0x138] sm:$0xff]
        %v181 = vld [vmem:[%s113 + $0x140] sm:$0xff]
        %v182 = vld [vmem:[%s113 + $0x148] sm:$0xff]
        %v183 = vld [vmem:[%s113 + $0x150] sm:$0xff]
        %v184 = vld [vmem:[%s113 + $0x158] sm:$0xff]
        %v185 = vld [vmem:[%s113 + $0x160] sm:$0xff]
        %v186 = vld [vmem:[%s113 + $0x168] sm:$0xff]
        %v187 = vld [vmem:[%s113 + $0x170] sm:$0xff]
        %v188 = vld [vmem:[%s113 + $0x178] sm:$0xff]
        %v189 = vld [vmem:[%s113 + $0x180] sm:$0xff]
        %v190 = vld [vmem:[%s113 + $0x188] sm:$0xff]
        %v191 = vld [vmem:[%s113 + $0x190] sm:$0xff]
        %v192 = vld [vmem:[%s113 + $0x198] sm:$0xff]
        %v193 = vld [vmem:[%s113 + $0x1a0] sm:$0xff]
        %v194 = vld [vmem:[%s113 + $0x1a8] sm:$0xff]
        %v195 = vld [vmem:[%s113 + $0x1b0] sm:$0xff]
        %v196 = vld [vmem:[%s113 + $0x1b8] sm:$0xff]
        %v197 = vld [vmem:[%s113 + $0x1c0] sm:$0xff]
        %v198 = vld [vmem:[%s113 + $0x1c8] sm:$0xff]
        %v199 = vld [vmem:[%s113 + $0x1d0] sm:$0xff]
        %v200 = vld [vmem:[%s113 + $0x1d8] sm:$0xff]
        %v201 = vld [vmem:[%s113 + $0x1e0] sm:$0xff]
        %v202 = vld [vmem:[%s113 + $0x1e8] sm:$0xff]
        %v203 = vld [vmem:[%s113 + $0x1f0] sm:$0xff]
        %v204 = vld [vmem:[%s113 + $0x1f8] sm:$0xff]
        %v205 = vld [vmem:[%s113 + $0x200] sm:$0xff]
        %v206 = vld [vmem:[%s113 + $0x208] sm:$0xff]
        %v207 = vld [vmem:[%s113 + $0x210] sm:$0xff]
        %v208 = vld [vmem:[%s113 + $0x218] sm:$0xff]
        %v209 = vld [vmem:[%s113 + $0x220] sm:$0xff]
        %v210 = vld [vmem:[%s113 + $0x228] sm:$0xff]
        %v211 = vld [vmem:[%s113 + $0x230] sm:$0xff]
        %v212 = vld [vmem:[%s113 + $0x238] sm:$0xff]
        %v213 = vld [vmem:[%s113 + $0x240] sm:$0xf]
        %v214 = vld [vmem:[%s113 + $0x248] sm:$0xf]
        %v215 = vld [vmem:[%s113 + $0x250] sm:$0xf]
        %216 = vxpose.xlu0.b32.start [1/16] %v141, 128
        %217 = vxpose.xlu0.b32.cont [2/16] %v144, 128
        %218 = vxpose.xlu0.b32.cont [3/16] %v147, 128
        %219 = vxpose.xlu0.b32.cont [4/16] %v150, 128
        %220 = vxpose.xlu0.b32.cont [5/16] %v153, 128
        %221 = vxpose.xlu0.b32.cont [6/16] %v156, 128
        %222 = vxpose.xlu0.b32.cont [7/16] %v159, 128
        %223 = vxpose.xlu0.b32.cont [8/16] %v162, 128
        %224 = vxpose.xlu0.b32.cont [9/16] %v165, 128
        %225 = vxpose.xlu0.b32.cont [10/16] %v168, 128
        %226 = vxpose.xlu0.b32.cont [11/16] %v171, 128
        %227 = vxpose.xlu0.b32.cont [12/16] %v174, 128
        %228 = vxpose.xlu0.b32.cont [13/16] %v177, 128
        %229 = vxpose.xlu0.b32.cont [14/16] %v180, 128
        %230 = vxpose.xlu0.b32.cont [15/16] %v183, 128
        %231 = vxpose.xlu0.b32.end [16/16] %v186, 128
        %v232 = vpop.trf.xlu0
        %v233 = vpop.trf.xlu0
        %v234 = vpop.trf.xlu0
        %v235 = vpop.trf.xlu0
        %v236 = vpop.trf.xlu0
        %v237 = vpop.trf.xlu0
        %v238 = vpop.trf.xlu0
        %v239 = vpop.trf.xlu0
        %v240 = vpop.trf.xlu0
        %v241 = vpop.trf.xlu0
        %v242 = vpop.trf.xlu0
        %v243 = vpop.trf.xlu0
        %v244 = vpop.trf.xlu0
        %v245 = vpop.trf.xlu0
        %v246 = vpop.trf.xlu0
        %v247 = vpop.trf.xlu0
        %248 = vxpose.xlu0.b32.start [1/16] %v142, 128
        %249 = vxpose.xlu0.b32.cont [2/16] %v145, 128
        %250 = vxpose.xlu0.b32.cont [3/16] %v148, 128
        %251 = vxpose.xlu0.b32.cont [4/16] %v151, 128
        %252 = vxpose.xlu0.b32.cont [5/16] %v154, 128
        %253 = vxpose.xlu0.b32.cont [6/16] %v157, 128
        %254 = vxpose.xlu0.b32.cont [7/16] %v160, 128
        %255 = vxpose.xlu0.b32.cont [8/16] %v163, 128
        %256 = vxpose.xlu0.b32.cont [9/16] %v166, 128
        %257 = vxpose.xlu0.b32.cont [10/16] %v169, 128
        %258 = vxpose.xlu0.b32.cont [11/16] %v172, 128
        %259 = vxpose.xlu0.b32.cont [12/16] %v175, 128
        %260 = vxpose.xlu0.b32.cont [13/16] %v178, 128
        %261 = vxpose.xlu0.b32.cont [14/16] %v181, 128
        %262 = vxpose.xlu0.b32.cont [15/16] %v184, 128
        %263 = vxpose.xlu0.b32.end [16/16] %v187, 128
        %v264 = vpop.trf.xlu0
        %v265 = vpop.trf.xlu0
        %v266 = vpop.trf.xlu0
        %v267 = vpop.trf.xlu0
        %v268 = vpop.trf.xlu0
        %v269 = vpop.trf.xlu0
        %v270 = vpop.trf.xlu0
        %v271 = vpop.trf.xlu0
        %v272 = vpop.trf.xlu0
        %v273 = vpop.trf.xlu0
        %v274 = vpop.trf.xlu0
        %v275 = vpop.trf.xlu0
        %v276 = vpop.trf.xlu0
        %v277 = vpop.trf.xlu0
        %v278 = vpop.trf.xlu0
        %v279 = vpop.trf.xlu0
        %280 = vxpose.xlu0.b32.start [1/16] %v143, 128
        %281 = vxpose.xlu0.b32.cont [2/16] %v146, 128
        %282 = vxpose.xlu0.b32.cont [3/16] %v149, 128
        %283 = vxpose.xlu0.b32.cont [4/16] %v152, 128
        %284 = vxpose.xlu0.b32.cont [5/16] %v155, 128
        %285 = vxpose.xlu0.b32.cont [6/16] %v158, 128
        %286 = vxpose.xlu0.b32.cont [7/16] %v161, 128
        %287 = vxpose.xlu0.b32.cont [8/16] %v164, 128
        %288 = vxpose.xlu0.b32.cont [9/16] %v167, 128
        %289 = vxpose.xlu0.b32.cont [10/16] %v170, 128
        %290 = vxpose.xlu0.b32.cont [11/16] %v173, 128
        %291 = vxpose.xlu0.b32.cont [12/16] %v176, 128
        %292 = vxpose.xlu0.b32.cont [13/16] %v179, 128
        %293 = vxpose.xlu0.b32.cont [14/16] %v182, 128
        %294 = vxpose.xlu0.b32.cont [15/16] %v185, 128
        %295 = vxpose.xlu0.b32.end [16/16] %v188, 128
        %v296 = vpop.trf.xlu0
        %v297 = vpop.trf.xlu0
        %v298 = vpop.trf.xlu0
        %v299 = vpop.trf.xlu0
        %v300 = vpop.trf.xlu0
        %v301 = vpop.trf.xlu0
        %v302 = vpop.trf.xlu0
        %v303 = vpop.trf.xlu0
        %v304 = vpop.trf.xlu0
        %v305 = vpop.trf.xlu0
        %v306 = vpop.trf.xlu0
        %v307 = vpop.trf.xlu0
        %v308 = vpop.trf.xlu0
        %v309 = vpop.trf.xlu0
        %v310 = vpop.trf.xlu0
        %v311 = vpop.trf.xlu0
        %312 = vxpose.xlu0.b32.start [1/16] %v189, 128
        %313 = vxpose.xlu0.b32.cont [2/16] %v192, 128
        %314 = vxpose.xlu0.b32.cont [3/16] %v195, 128
        %315 = vxpose.xlu0.b32.cont [4/16] %v198, 128
        %316 = vxpose.xlu0.b32.cont [5/16] %v201, 128
        %317 = vxpose.xlu0.b32.cont [6/16] %v204, 128
        %318 = vxpose.xlu0.b32.cont [7/16] %v207, 128
        %319 = vxpose.xlu0.b32.cont [8/16] %v210, 128
        %320 = vxpose.xlu0.b32.cont [9/16] %v213, 128
        %321 = vxpose.xlu0.b32.cont [10/16] 0.0, 128
        %322 = vxpose.xlu0.b32.cont [11/16] 0.0, 128
        %323 = vxpose.xlu0.b32.cont [12/16] 0.0, 128
        %324 = vxpose.xlu0.b32.cont [13/16] 0.0, 128
        %325 = vxpose.xlu0.b32.cont [14/16] 0.0, 128
        %326 = vxpose.xlu0.b32.cont [15/16] 0.0, 128
        %327 = vxpose.xlu0.b32.end [16/16] 0.0, 128
        %v328 = vpop.trf.xlu0
        %v329 = vpop.trf.xlu0
        %v330 = vpop.trf.xlu0
        %v331 = vpop.trf.xlu0
        %v332 = vpop.trf.xlu0
        %v333 = vpop.trf.xlu0
        %v334 = vpop.trf.xlu0
        %v335 = vpop.trf.xlu0
        %v336 = vpop.trf.xlu0
        %v337 = vpop.trf.xlu0
        %v338 = vpop.trf.xlu0
        %v339 = vpop.trf.xlu0
        %v340 = vpop.trf.xlu0
        %v341 = vpop.trf.xlu0
        %v342 = vpop.trf.xlu0
        %v343 = vpop.trf.xlu0
        %344 = vxpose.xlu0.b32.start [1/16] %v190, 128
        %345 = vxpose.xlu0.b32.cont [2/16] %v193, 128
        %346 = vxpose.xlu0.b32.cont [3/16] %v196, 128
        %347 = vxpose.xlu0.b32.cont [4/16] %v199, 128
        %348 = vxpose.xlu0.b32.cont [5/16] %v202, 128
        %349 = vxpose.xlu0.b32.cont [6/16] %v205, 128
        %350 = vxpose.xlu0.b32.cont [7/16] %v208, 128
        %351 = vxpose.xlu0.b32.cont [8/16] %v211, 128
        %352 = vxpose.xlu0.b32.cont [9/16] %v214, 128
        %353 = vxpose.xlu0.b32.cont [10/16] 0.0, 128
        %354 = vxpose.xlu0.b32.cont [11/16] 0.0, 128
        %355 = vxpose.xlu0.b32.cont [12/16] 0.0, 128
        %356 = vxpose.xlu0.b32.cont [13/16] 0.0, 128
        %357 = vxpose.xlu0.b32.cont [14/16] 0.0, 128
        %358 = vxpose.xlu0.b32.cont [15/16] 0.0, 128
        %359 = vxpose.xlu0.b32.end [16/16] 0.0, 128
        %v360 = vpop.trf.xlu0
        %v361 = vpop.trf.xlu0
        %v362 = vpop.trf.xlu0
        %v363 = vpop.trf.xlu0
        %v364 = vpop.trf.xlu0
        %v365 = vpop.trf.xlu0
        %v366 = vpop.trf.xlu0
        %v367 = vpop.trf.xlu0
        %v368 = vpop.trf.xlu0
        %v369 = vpop.trf.xlu0
        %v370 = vpop.trf.xlu0
        %v371 = vpop.trf.xlu0
        %v372 = vpop.trf.xlu0
        %v373 = vpop.trf.xlu0
        %v374 = vpop.trf.xlu0
        %v375 = vpop.trf.xlu0
        %376 = vxpose.xlu0.b32.start [1/16] %v191, 128
        %377 = vxpose.xlu0.b32.cont [2/16] %v194, 128
        %378 = vxpose.xlu0.b32.cont [3/16] %v197, 128
        %379 = vxpose.xlu0.b32.cont [4/16] %v200, 128
        %380 = vxpose.xlu0.b32.cont [5/16] %v203, 128
        %381 = vxpose.xlu0.b32.cont [6/16] %v206, 128
        %382 = vxpose.xlu0.b32.cont [7/16] %v209, 128
        %383 = vxpose.xlu0.b32.cont [8/16] %v212, 128
        %384 = vxpose.xlu0.b32.cont [9/16] %v215, 128
        %385 = vxpose.xlu0.b32.cont [10/16] 0.0, 128
        %386 = vxpose.xlu0.b32.cont [11/16] 0.0, 128
        %387 = vxpose.xlu0.b32.cont [12/16] 0.0, 128
        %388 = vxpose.xlu0.b32.cont [13/16] 0.0, 128
        %389 = vxpose.xlu0.b32.cont [14/16] 0.0, 128
        %390 = vxpose.xlu0.b32.cont [15/16] 0.0, 128
        %391 = vxpose.xlu0.b32.end [16/16] 0.0, 128
        %v392 = vpop.trf.xlu0
        %v393 = vpop.trf.xlu0
        %v394 = vpop.trf.xlu0
        %v395 = vpop.trf.xlu0
        %v396 = vpop.trf.xlu0
        %v397 = vpop.trf.xlu0
        %v398 = vpop.trf.xlu0
        %v399 = vpop.trf.xlu0
        %v400 = vpop.trf.xlu0
        %v401 = vpop.trf.xlu0
        %v402 = vpop.trf.xlu0
        %v403 = vpop.trf.xlu0
        %v404 = vpop.trf.xlu0
        %v405 = vpop.trf.xlu0
        %v406 = vpop.trf.xlu0
        %v407 = vpop.trf.xlu0
        %408 = vst [vmem:[%s139] sm:$0xff] %v232
        %vm409 = vcmask 556032
        %410 = vst.msk [vmem:[%s139 + $0x8] sm:$0xff] %vm409, %v328
        %411 = vst [vmem:[%s139 + $0x10] sm:$0xff] %v233
        %412 = vst.msk [vmem:[%s139 + $0x18] sm:$0xff] %vm409, %v329
        %413 = vst [vmem:[%s139 + $0x20] sm:$0xff] %v234
        %414 = vst.msk [vmem:[%s139 + $0x28] sm:$0xff] %vm409, %v330
        %415 = vst [vmem:[%s139 + $0x30] sm:$0xff] %v235
        %416 = vst.msk [vmem:[%s139 + $0x38] sm:$0xff] %vm409, %v331
        %417 = vst [vmem:[%s139 + $0x40] sm:$0xff] %v236
        %418 = vst.msk [vmem:[%s139 + $0x48] sm:$0xff] %vm409, %v332
        %419 = vst [vmem:[%s139 + $0x50] sm:$0xff] %v237
        %420 = vst.msk [vmem:[%s139 + $0x58] sm:$0xff] %vm409, %v333
        %421 = vst [vmem:[%s139 + $0x60] sm:$0xff] %v238
        %422 = vst.msk [vmem:[%s139 + $0x68] sm:$0xff] %vm409, %v334
        %423 = vst [vmem:[%s139 + $0x70] sm:$0xff] %v239
        %424 = vst.msk [vmem:[%s139 + $0x78] sm:$0xff] %vm409, %v335
        %425 = vst [vmem:[%s139 + $0x80] sm:$0xff] %v240
        %426 = vst.msk [vmem:[%s139 + $0x88] sm:$0xff] %vm409, %v336
        %427 = vst [vmem:[%s139 + $0x90] sm:$0xff] %v241
        %428 = vst.msk [vmem:[%s139 + $0x98] sm:$0xff] %vm409, %v337
        %429 = vst [vmem:[%s139 + $0xa0] sm:$0xff] %v242
        %430 = vst.msk [vmem:[%s139 + $0xa8] sm:$0xff] %vm409, %v338
        %431 = vst [vmem:[%s139 + $0xb0] sm:$0xff] %v243
        %432 = vst.msk [vmem:[%s139 + $0xb8] sm:$0xff] %vm409, %v339
        %433 = vst [vmem:[%s139 + $0xc0] sm:$0xff] %v244
        %434 = vst.msk [vmem:[%s139 + $0xc8] sm:$0xff] %vm409, %v340
        %435 = vst [vmem:[%s139 + $0xd0] sm:$0xff] %v245
        %436 = vst.msk [vmem:[%s139 + $0xd8] sm:$0xff] %vm409, %v341
        %437 = vst [vmem:[%s139 + $0xe0] sm:$0xff] %v246
        %438 = vst.msk [vmem:[%s139 + $0xe8] sm:$0xff] %vm409, %v342
        %439 = vst [vmem:[%s139 + $0xf0] sm:$0xff] %v247
        %440 = vst.msk [vmem:[%s139 + $0xf8] sm:$0xff] %vm409, %v343
        %441 = vst [vmem:[%s139 + $0x100] sm:$0xff] %v264
        %442 = vst.msk [vmem:[%s139 + $0x108] sm:$0xff] %vm409, %v360
        %443 = vst [vmem:[%s139 + $0x110] sm:$0xff] %v265
        %444 = vst.msk [vmem:[%s139 + $0x118] sm:$0xff] %vm409, %v361
        %445 = vst [vmem:[%s139 + $0x120] sm:$0xff] %v266
        %446 = vst.msk [vmem:[%s139 + $0x128] sm:$0xff] %vm409, %v362
        %447 = vst [vmem:[%s139 + $0x130] sm:$0xff] %v267
        %448 = vst.msk [vmem:[%s139 + $0x138] sm:$0xff] %vm409, %v363
        %449 = vst [vmem:[%s139 + $0x140] sm:$0xff] %v268
        %450 = vst.msk [vmem:[%s139 + $0x148] sm:$0xff] %vm409, %v364
        %451 = vst [vmem:[%s139 + $0x150] sm:$0xff] %v269
        %452 = vst.msk [vmem:[%s139 + $0x158] sm:$0xff] %vm409, %v365
        %453 = vst [vmem:[%s139 + $0x160] sm:$0xff] %v270
        %454 = vst.msk [vmem:[%s139 + $0x168] sm:$0xff] %vm409, %v366
        %455 = vst [vmem:[%s139 + $0x170] sm:$0xff] %v271
        %456 = vst.msk [vmem:[%s139 + $0x178] sm:$0xff] %vm409, %v367
        %457 = vst [vmem:[%s139 + $0x180] sm:$0xff] %v272
        %458 = vst.msk [vmem:[%s139 + $0x188] sm:$0xff] %vm409, %v368
        %459 = vst [vmem:[%s139 + $0x190] sm:$0xff] %v273
        %460 = vst.msk [vmem:[%s139 + $0x198] sm:$0xff] %vm409, %v369
        %461 = vst [vmem:[%s139 + $0x1a0] sm:$0xff] %v274
        %462 = vst.msk [vmem:[%s139 + $0x1a8] sm:$0xff] %vm409, %v370
        %463 = vst [vmem:[%s139 + $0x1b0] sm:$0xff] %v275
        %464 = vst.msk [vmem:[%s139 + $0x1b8] sm:$0xff] %vm409, %v371
        %465 = vst [vmem:[%s139 + $0x1c0] sm:$0xff] %v276
        %466 = vst.msk [vmem:[%s139 + $0x1c8] sm:$0xff] %vm409, %v372
        %467 = vst [vmem:[%s139 + $0x1d0] sm:$0xff] %v277
        %468 = vst.msk [vmem:[%s139 + $0x1d8] sm:$0xff] %vm409, %v373
        %469 = vst [vmem:[%s139 + $0x1e0] sm:$0xff] %v278
        %470 = vst.msk [vmem:[%s139 + $0x1e8] sm:$0xff] %vm409, %v374
        %471 = vst [vmem:[%s139 + $0x1f0] sm:$0xff] %v279
        %472 = vst.msk [vmem:[%s139 + $0x1f8] sm:$0xff] %vm409, %v375
        %473 = vst [vmem:[%s139 + $0x200] sm:$0xff] %v296
        %474 = vst.msk [vmem:[%s139 + $0x208] sm:$0xff] %vm409, %v392
        %475 = vst [vmem:[%s139 + $0x210] sm:$0xff] %v297
        %476 = vst.msk [vmem:[%s139 + $0x218] sm:$0xff] %vm409, %v393
        %477 = vst [vmem:[%s139 + $0x220] sm:$0xff] %v298
        %478 = vst.msk [vmem:[%s139 + $0x228] sm:$0xff] %vm409, %v394
        %479 = vst [vmem:[%s139 + $0x230] sm:$0xff] %v299
        %480 = vst.msk [vmem:[%s139 + $0x238] sm:$0xff] %vm409, %v395
        %481 = vst [vmem:[%s139 + $0x240] sm:$0xff] %v300
        %482 = vst.msk [vmem:[%s139 + $0x248] sm:$0xff] %vm409, %v396
        %483 = vst [vmem:[%s139 + $0x250] sm:$0xff] %v301
        %484 = vst.msk [vmem:[%s139 + $0x258] sm:$0xff] %vm409, %v397
        %485 = vst [vmem:[%s139 + $0x260] sm:$0xff] %v302
        %486 = vst.msk [vmem:[%s139 + $0x268] sm:$0xff] %vm409, %v398
        %487 = vst [vmem:[%s139 + $0x270] sm:$0xff] %v303
        %488 = vst.msk [vmem:[%s139 + $0x278] sm:$0xff] %vm409, %v399
        %489 = vst [vmem:[%s139 + $0x280] sm:$0xff] %v304
        %490 = vst.msk [vmem:[%s139 + $0x288] sm:$0xff] %vm409, %v400
        %491 = vst [vmem:[%s139 + $0x290] sm:$0xff] %v305
        %492 = vst.msk [vmem:[%s139 + $0x298] sm:$0xff] %vm409, %v401
        %493 = vst [vmem:[%s139 + $0x2a0] sm:$0xff] %v306
        %494 = vst.msk [vmem:[%s139 + $0x2a8] sm:$0xff] %vm409, %v402
        %495 = vst [vmem:[%s139 + $0x2b0] sm:$0xff] %v307
        %496 = vst.msk [vmem:[%s139 + $0x2b8] sm:$0xff] %vm409, %v403
        %497 = vst [vmem:[%s139 + $0x2c0] sm:$0xff] %v308
        %498 = vst.msk [vmem:[%s139 + $0x2c8] sm:$0xff] %vm409, %v404
        %499 = vst [vmem:[%s139 + $0x2d0] sm:$0xff] %v309
        %500 = vst.msk [vmem:[%s139 + $0x2d8] sm:$0xff] %vm409, %v405
        %501 = vst [vmem:[%s139 + $0x2e0] sm:$0xff] %v310
        %502 = vst.msk [vmem:[%s139 + $0x2e8] sm:$0xff] %vm409, %v406
        %503 = vst [vmem:[%s139 + $0x2f0] sm:$0xff] %v311
        %504 = vst.msk [vmem:[%s139 + $0x2f8] sm:$0xff] %vm409, %v407
        %s505 = smul.u32 48, %s15
        %p506 = scmp.lt.s32.totalorder %s505, 95
        %s507 = scalar_select %p506, %s505, 95
        %s508 = smul.addr %s507, 2
        %s509 = smul.addr %s508, 8
        %s510 = scalar_lea.vmem %s1, %s509
        // Predicated region
        $region29: #{tpu_custom_call.1} parent=23 // pred_check
          %p511 = pneg %p59
        $region30: #{tpu_custom_call.1} parent=23 // pred_check_branch
          %513 = sbr.rel (%p511) target = $region32
        $region31: #{tpu_custom_call.1} parent=23 // pred_region
          %s514 = smul.u32 48, %s15
        $region32: #{tpu_custom_call.1} parent=23 // pred_fallthru
          _
      $region24: #{tpu_custom_call.1} parent=5 // pred_fallthru
        _
      %p515 = scmp.le.s32.totalorder 2, %s10
      // Predicated region
      $region33: #{tpu_custom_call.1} parent=5 // pred_check
        %p516 = pneg %p515
      $region34: #{tpu_custom_call.1} parent=5 // pred_check_branch
        %518 = sbr.rel (%p516) target = $region36
      $region35: #{tpu_custom_call.1} parent=5 // pred_region
        %s519 = ssub.s32 %s10, 2
        // Predicated region
        $region37: #{tpu_custom_call.1} parent=35 // pred_check
          %p520 = pneg %p65
        $region38: #{tpu_custom_call.1} parent=35 // pred_check_branch
          %522 = sbr.rel (%p520) target = $region40
        $region39: #{tpu_custom_call.1} parent=35 // pred_region
          %s523 = smul.u32 48, %s16
          %p524 = scmp.lt.s32.totalorder %s523, 95
          %s525 = scalar_select %p524, %s523, 95
          %s526 = smul.addr %s525, 2
          %s527 = smul.addr %s526, 8
          %s528 = scalar_lea.vmem %s1, %s527
        $region40: #{tpu_custom_call.1} parent=35 // pred_fallthru
          _
      $region36: #{tpu_custom_call.1} parent=5 // pred_fallthru
        _
    $region6: #{tpu_custom_call.1} parent=1 // loop_footer
      %s14 = sadd.s32 1, %s10
    $region7: #{tpu_custom_call.1} parent=1 // loop_footer_branch
      %9 = sbr.rel target = $region3
    $region8: #{tpu_custom_call.1} parent=1 // loop_exit
      _
    %529 = vsyncpa [#allocation3], 1
    %s530 = scalar_lea.sflag [#allocation3], 1
    %531 = vsyncpa %s530, 1

</llo_original>
